<compile_context>
chip_gen: v7x
topology: tpu7x:2x2x1
jax: 0.10.0
libtpu: 0.0.40
codegen_flags: <defaults>
</compile_context>

<pallas_src>
import functools

import jax
import jax.numpy as jnp
from jax.experimental import pallas as pl
from jax.experimental.pallas import tpu as pltpu


def _round_up(a, b):
    return (a + b - 1) // b * b


def _vmem_budget_and_cap():
    """(block budget, physical capacity) in bytes, per TensorCore."""
    cap = 64 * 1024 * 1024                       # conservative default (v7x)
    try:
        info = pltpu.get_tpu_info()
        cap = int(getattr(info, "vmem_capacity_bytes", cap))
    except Exception:
        pass
    # ~48 MiB on v7x (64 MiB VMEM), ~96 MiB on v5e/v6e (128 MiB VMEM); the
    # remaining quarter is headroom for internal scratch / semaphores.
    return (cap * 3) // 4, cap


def _estimate_vmem(tm, th, d, x_isz, w_isz, b_isz):
    """Per-step VMEM working set: double-buffered blocks + f32 accumulator."""
    return (2 * tm * d * x_isz            # x rows
            + 2 * 2 * d * th * w_isz      # W_gate + W_up slices
            + 2 * 2 * 8 * th * b_isz      # b_gate + b_up (sublane-padded rows)
            + 2 * th * d * w_isz          # W2 slice
            + 2 * 8 * d * b_isz           # b2
            + 2 * tm * d * x_isz          # output rows
            + tm * d * 4)                 # f32 accumulator scratch


def _choose_tiles(m, d, hidden_pad, gran, x_isz, w_isz, b_isz,
                  budget, tm_max, th_max):
    """Pick (tm, th) from the VMEM budget; tm has priority (weight streaming)."""
    tm_cap = _round_up(m, 8)
    base_tm = (1024, 768, 512, 384, 256, 192, 128, 96, 64, 48, 32, 24, 16, 8)
    tm_cands = sorted({min(t, tm_cap, tm_max) for t in base_tm}, reverse=True)

    th_hi = max(gran, min(_round_up(th_max, gran), hidden_pad))
    th_cands = [t for t in range(th_hi, gran - 1, -gran) if hidden_pad % t == 0]

    # Larger tm first: every row tile re-streams the whole weight set, so tm
    # sets arithmetic intensity vs. HBM weight traffic.  Then the largest th
    # (fewer accumulator RMW steps / per-step overheads) that still fits.
    for tmc in tm_cands:
        for thc in th_cands:
            if _estimate_vmem(tmc, thc, d, x_isz, w_isz, b_isz) <= budget:
                return tmc, thc
    return tm_cands[-1], th_cands[-1]    # fallback: smallest tiles


def swiglu_kernel(x_ref, wg_ref, bg_ref, wu_ref, bu_ref, w2_ref, b2_ref,
                  o_ref, acc_ref, *, approx_sigmoid):
    # x_ref  : (tm, D)   input rows           (native dtype, e.g. bf16/f32)
    # wg_ref : (D, th)   gate half of W1 slice
    # bg_ref : (1, th)   gate half of b1 slice
    # wu_ref : (D, th)   up   half of W1 slice
    # bu_ref : (1, th)   up   half of b1 slice
    # w2_ref : (th, D)   W2 slice
    # b2_ref : (1, D)    b2 (grid-invariant)
    # o_ref  : (tm, D)   output rows
    # acc_ref: (tm, D)   f32 accumulator, resident across the hidden grid axis
    h_idx = pl.program_id(1)

    x = x_ref[...]  # do NOT upcast: keep MXU operands in the native dtype

    # linear1 for this hidden slice, f32 accumulation on the MXU.
    g = jnp.dot(x, wg_ref[...], preferred_element_type=jnp.float32)
    g = g + bg_ref[...].astype(jnp.float32)
    u = jnp.dot(x, wu_ref[...], preferred_element_type=jnp.float32)
    u = u + bu_ref[...].astype(jnp.float32)

    # SiLU(gate) * up.  exp goes to the EUP; the approximate reciprocal also
    # runs on the EUP slot instead of a multi-op VPU Newton-Raphson divide.
    if approx_sigmoid:
        s = pl.reciprocal(1.0 + jnp.exp(-g), approx=True)
    else:
        s = jax.nn.sigmoid(g)
    gated = g * s * u

    # Partial linear2: (tm, th) @ (th, D); cast LHS to the weight dtype so
    # bf16 weights hit the full-rate MXU path, accumulate in f32.
    partial = jnp.dot(gated.astype(w2_ref.dtype), w2_ref[...],
                      preferred_element_type=jnp.float32)

    @pl.when(h_idx == 0)
    def _first():
        acc_ref[...] = partial           # skip zero-init + RMW on step 0

    @pl.when(h_idx > 0)
    def _accum():
        acc_ref[...] += partial

    @pl.when(h_idx == pl.num_programs(1) - 1)
    def _finalize():
        out = acc_ref[...] + b2_ref[...].astype(jnp.float32)
        o_ref[...] = out.astype(o_ref.dtype)


def swiglu_pallas(x, w1, b1, w2, b2, *, tm=None, th=None,
                  approx_sigmoid=True, weights_dtype=None):
    """SwiGLU forward: linear2(silu(x@Wg+bg) * (x@Wu+bu)).

    x: (..., D); w1: (D, 2H); b1: (2H,) or (1,2H); w2: (H, D); b2: (D,) or (1,D)
    tm / th: optional row / hidden tile caps (auto-sized to VMEM otherwise).
    weights_dtype: optional cast for x/W1/W2 (e.g. jnp.bfloat16 — halves weight
      HBM traffic everywhere and is essentially required for speed on v5e;
      accumulation stays f32).  Default None keeps exact reference numerics.
    Returns the same shape / dtype as x.
    """
    orig_shape = x.shape
    d = orig_shape[-1]
    x2d = x.reshape(-1, d)
    m = x2d.shape[0]

    b1 = b1.reshape(1, -1)
    b2 = b2.reshape(1, -1)
    hidden = w1.shape[1] // 2

    if weights_dtype is not None:
        w1 = w1.astype(weights_dtype)
        w2 = w2.astype(weights_dtype)
        x2d = x2d.astype(weights_dtype)

    # Split linear1 into gate / up halves outside the kernel (avoids slicing a
    # lane-contiguous (tm, 2H) buffer inside VMEM).
    wg, wu = w1[:, :hidden], w1[:, hidden:]
    bg, bu = b1[:, :hidden], b1[:, hidden:]

    # Hidden tiling granularity: multiples of 256 keep both matmuls at the full
    # MXU depth on v6e/v7x.  If hidden is not a multiple, zero-pad it — padded
    # columns are inert for SwiGLU (silu(0)*u = 0, and the matching W2 rows are
    # zero) — instead of falling back to th=128 or a VMEM-blowing th=hidden.
    gran = 256 if hidden > 128 else 128
    hidden_pad = _round_up(hidden, gran)
    if hidden_pad != hidden:
        hp = hidden_pad - hidden
        wg = jnp.pad(wg, ((0, 0), (0, hp)))
        wu = jnp.pad(wu, ((0, 0), (0, hp)))
        bg = jnp.pad(bg, ((0, 0), (0, hp)))
        bu = jnp.pad(bu, ((0, 0), (0, hp)))
        w2 = jnp.pad(w2, ((0, hp), (0, 0)))

    # Generation-aware VMEM budgeting: size tiles to the budget first, then set
    # vmem_limit_bytes from the actual working set (never clamp below it).
    budget, cap = _vmem_budget_and_cap()
    x_isz = x2d.dtype.itemsize
    w_isz = wg.dtype.itemsize
    b_isz = bg.dtype.itemsize
    tm_max = _round_up(tm, 8) if tm is not None else 1024
    th_max = th if th is not None else 512
    tm, th = _choose_tiles(m, d, hidden_pad, gran, x_isz, w_isz, b_isz,
                           budget, tm_max, th_max)

    m_pad = _round_up(m, tm)
    if m_pad != m:
        x2d = jnp.pad(x2d, ((0, m_pad - m), (0, 0)))

    grid = (m_pad // tm, hidden_pad // th)

    est = _estimate_vmem(tm, th, d, x_isz, w_isz, b_isz)
    vmem_limit = max(32 * 1024 * 1024, est + 4 * 1024 * 1024)
    vmem_limit = min(vmem_limit, cap)
    vmem_limit = int(max(vmem_limit, est))   # never below the working set

    kernel = functools.partial(swiglu_kernel, approx_sigmoid=approx_sigmoid)

    out = pl.pallas_call(
        kernel,
        out_shape=jax.ShapeDtypeStruct((m_pad, d), x.dtype),
        grid_spec=pltpu.PrefetchScalarGridSpec(
            num_scalar_prefetch=0,
            grid=grid,
            in_specs=[
                pl.BlockSpec((tm, d), lambda i, h: (i, 0)),    # x rows
                pl.BlockSpec((d, th), lambda i, h: (0, h)),    # W_gate slice
                pl.BlockSpec((1, th), lambda i, h: (0, h)),    # b_gate slice
                pl.BlockSpec((d, th), lambda i, h: (0, h)),    # W_up slice
                pl.BlockSpec((1, th), lambda i, h: (0, h)),    # b_up slice
                pl.BlockSpec((th, d), lambda i, h: (h, 0)),    # W2 slice
                # b2 is grid-invariant; pipeline_mode=pl.Buffered(1) would save
                # one tiny buffer — left default (trivial, keep compile robust).
                pl.BlockSpec((1, d), lambda i, h: (0, 0)),     # b2
            ],
            out_specs=pl.BlockSpec((tm, d), lambda i, h: (i, 0)),
            scratch_shapes=[pltpu.VMEM((tm, d), jnp.float32)],
        ),
        compiler_params=pltpu.CompilerParams(
            # rows parallel (megacore / v7x 2-TC sharding); hidden reduction last
            dimension_semantics=("parallel", "arbitrary"),
            vmem_limit_bytes=vmem_limit,
        ),
    )(x2d, wg, bg, wu, bu, w2, b2)

    if m_pad != m:
        out = out[:m]
    return out.reshape(orig_shape)


def init_params(key, input_dim, mlp_ratio=4, dtype=jnp.float32):
    """Deterministic init mirroring nn.Linear shapes (uniform +-1/sqrt(fan_in))."""
    hidden_dim = mlp_ratio * input_dim
    k1, k2, k3, k4 = jax.random.split(key, 4)
    bound1 = 1.0 / (input_dim ** 0.5)
    bound2 = 1.0 / (hidden_dim ** 0.5)
    w1 = jax.random.uniform(k1, (input_dim, 2 * hidden_dim), dtype,
                            minval=-bound1, maxval=bound1)
    b1 = jax.random.uniform(k2, (1, 2 * hidden_dim), dtype,
                            minval=-bound1, maxval=bound1)
    w2 = jax.random.uniform(k3, (hidden_dim, input_dim), dtype,
                            minval=-bound2, maxval=bound2)
    b2 = jax.random.uniform(k4, (1, input_dim), dtype,
                            minval=-bound2, maxval=bound2)
    return w1, b1, w2, b2


def swiglu_ref(x, w1, b1, w2, b2):
    h = x @ w1 + b1
    hidden = h.shape[-1] // 2
    x1, x2 = h[..., :hidden], h[..., hidden:]
    g = jax.nn.silu(x1) * x2
    return g @ w2 + b2


if __name__ == "__main__":
    key = jax.random.PRNGKey(0)
    k_x, k_p, k_x2, k_p2, k_x3, k_p3 = jax.random.split(key, 6)

    # --- 1) module defaults at small shapes (mlp_ratio=4, hidden=128) ---
    batch, seq, input_dim = 2, 8, 32
    x = jax.random.normal(k_x, (batch, seq, input_dim), jnp.float32)
    w1, b1, w2, b2 = init_params(k_p, input_dim, mlp_ratio=4)
    out = jax.block_until_ready(swiglu_pallas(x, w1, b1, w2, b2))
    ref = swiglu_ref(x.reshape(-1, input_dim), w1, b1, w2, b2).reshape(x.shape)
    assert out.shape == x.shape and out.dtype == x.dtype
    assert jnp.allclose(out, ref, atol=2e-3, rtol=2e-3)

    # --- 2) multiple row tiles + multi-step hidden accumulation (grid 2x2) ---
    bb, ss, dd = 2, 256, 128                        # hidden = 512
    x_b = jax.random.normal(k_x2, (bb, ss, dd), jnp.float32)
    w1b, b1b, w2b, b2b = init_params(k_p2, dd, mlp_ratio=4)
    out_b = jax.block_until_ready(
        swiglu_pallas(x_b, w1b, b1b, w2b, b2b, tm=256, th=256))
    ref_b = swiglu_ref(x_b.reshape(-1, dd), w1b, b1b, w2b, b2b).reshape(x_b.shape)
    assert jnp.allclose(out_b, ref_b, atol=2e-3, rtol=2e-3)

    # --- 3) ragged rows + hidden not a multiple of 256 (zero-padded hidden) ---
    dc = 96                                         # hidden = 384 -> padded 512
    x_c = jax.random.normal(k_x3, (1, 40, dc), jnp.float32)
    w1c, b1c, w2c, b2c = init_params(k_p3, dc, mlp_ratio=4)
    out_c = jax.block_until_ready(swiglu_pallas(x_c, w1c, b1c, w2c, b2c, th=256))
    ref_c = swiglu_ref(x_c.reshape(-1, dc), w1c, b1c, w2c, b2c).reshape(x_c.shape)
    assert jnp.allclose(out_c, ref_c, atol=2e-3, rtol=2e-3)

    # --- 4) bf16 weight/activation path (halves weight DMA; key for v5e) ---
    out_bf = jax.block_until_ready(
        swiglu_pallas(x, w1, b1, w2, b2, weights_dtype=jnp.bfloat16))
    assert out_bf.dtype == x.dtype
    assert jnp.allclose(out_bf, ref, atol=5e-2, rtol=5e-2)

    print("KERNEL_OK")
</pallas_src>

<mosaic_0001>
module attributes {stable_mosaic.version = 11 : i64} {
  func.func @swiglu_kernel(%arg0: i32, %arg1: i32, %arg2: memref<16x32xf32, #tpu.memory_space<vmem>>, %arg3: memref<32x128xf32, #tpu.memory_space<vmem>>, %arg4: memref<1x128xf32, #tpu.memory_space<vmem>>, %arg5: memref<32x128xf32, #tpu.memory_space<vmem>>, %arg6: memref<1x128xf32, #tpu.memory_space<vmem>>, %arg7: memref<128x32xf32, #tpu.memory_space<vmem>>, %arg8: memref<1x32xf32, #tpu.memory_space<vmem>>, %arg9: memref<16x32xf32, #tpu.memory_space<vmem>>, %arg10: memref<16x32xf32, #tpu.memory_space<vmem>>) attributes {dimension_semantics = [#tpu.dimension_semantics<parallel>, #tpu.dimension_semantics<arbitrary>], iteration_bounds = array<i64: 1, 1>, scalar_prefetch = 0 : i64, scratch_operands = 1 : i64, tpu.core_type = #tpu.core_type<tc>, window_params = [{transform_indices = @transform_0, window_bounds = array<i64: 16, 32>}, {transform_indices = @transform_1, window_bounds = array<i64: 32, 128>}, {transform_indices = @transform_2, window_bounds = array<i64: 1, 128>}, {transform_indices = @transform_3, window_bounds = array<i64: 32, 128>}, {transform_indices = @transform_4, window_bounds = array<i64: 1, 128>}, {transform_indices = @transform_5, window_bounds = array<i64: 128, 32>}, {pipeline_mode = #tpu.pipeline_mode<synchronous>, transform_indices = @transform_6, window_bounds = array<i64: 1, 32>}, {transform_indices = @transform_7, window_bounds = array<i64: 16, 32>}]} {
    %c0 = arith.constant 0 : index
    %c0_0 = arith.constant 0 : index
    %0 = vector.load %arg2[%c0, %c0_0] : memref<16x32xf32, #tpu.memory_space<vmem>>, vector<16x32xf32>
    %c0_1 = arith.constant 0 : index
    %c0_2 = arith.constant 0 : index
    %1 = vector.load %arg3[%c0_1, %c0_2] : memref<32x128xf32, #tpu.memory_space<vmem>>, vector<32x128xf32>
    %cst = arith.constant dense<0.000000e+00> : vector<16x128xf32>
    %2 = tpu.matmul %0, %1, %cst {dimension_numbers = #tpu.dot_dimension_numbers<[1], [0], [0], [1], [0, 0, 1, 1], [], []>} : vector<16x32xf32>, vector<32x128xf32>, vector<16x128xf32> -> vector<16x128xf32>
    %c0_3 = arith.constant 0 : index
    %c0_4 = arith.constant 0 : index
    %3 = vector.load %arg4[%c0_3, %c0_4] : memref<1x128xf32, #tpu.memory_space<vmem>>, vector<1x128xf32>
    %4 = vector.broadcast %3 : vector<1x128xf32> to vector<16x128xf32>
    %5 = arith.addf %2, %4 : vector<16x128xf32>
    %c0_5 = arith.constant 0 : index
    %c0_6 = arith.constant 0 : index
    %6 = vector.load %arg5[%c0_5, %c0_6] : memref<32x128xf32, #tpu.memory_space<vmem>>, vector<32x128xf32>
    %cst_7 = arith.constant dense<0.000000e+00> : vector<16x128xf32>
    %7 = tpu.matmul %0, %6, %cst_7 {dimension_numbers = #tpu.dot_dimension_numbers<[1], [0], [0], [1], [0, 0, 1, 1], [], []>} : vector<16x32xf32>, vector<32x128xf32>, vector<16x128xf32> -> vector<16x128xf32>
    %c0_8 = arith.constant 0 : index
    %c0_9 = arith.constant 0 : index
    %8 = vector.load %arg6[%c0_8, %c0_9] : memref<1x128xf32, #tpu.memory_space<vmem>>, vector<1x128xf32>
    %9 = vector.broadcast %8 : vector<1x128xf32> to vector<16x128xf32>
    %10 = arith.addf %7, %9 : vector<16x128xf32>
    %cst_10 = arith.constant 0.000000e+00 : f32
    %11 = vector.broadcast %cst_10 : f32 to vector<16x128xf32>
    %12 = arith.subf %11, %5 : vector<16x128xf32>
    %13 = math.exp %12 : vector<16x128xf32>
    %cst_11 = arith.constant 1.000000e+00 : f32
    %14 = vector.broadcast %cst_11 : f32 to vector<16x128xf32>
    %15 = arith.addf %14, %13 : vector<16x128xf32>
    %16 = tpu.reciprocal %15 {approx = true} : vector<16x128xf32> -> vector<16x128xf32>
    %17 = arith.mulf %5, %16 : vector<16x128xf32>
    %18 = arith.mulf %17, %10 : vector<16x128xf32>
    %c0_12 = arith.constant 0 : index
    %c0_13 = arith.constant 0 : index
    %19 = vector.load %arg7[%c0_12, %c0_13] : memref<128x32xf32, #tpu.memory_space<vmem>>, vector<128x32xf32>
    %cst_14 = arith.constant dense<0.000000e+00> : vector<16x32xf32>
    %20 = tpu.matmul %18, %19, %cst_14 {dimension_numbers = #tpu.dot_dimension_numbers<[1], [0], [0], [1], [0, 0, 1, 1], [], []>} : vector<16x128xf32>, vector<128x32xf32>, vector<16x32xf32> -> vector<16x32xf32>
    %c0_i32 = arith.constant 0 : i32
    %21 = arith.cmpi eq, %arg1, %c0_i32 : i32
    %22 = arith.extui %21 : i1 to i32
    %c0_i32_15 = arith.constant 0 : i32
    %23 = arith.cmpi ne, %22, %c0_i32_15 : i32
    scf.if %23 {
      %c0_20 = arith.constant 0 : index
      %c0_21 = arith.constant 0 : index
      %30 = vector.load %arg10[%c0_20, %c0_21] : memref<16x32xf32, #tpu.memory_space<vmem>>, vector<16x32xf32>
      tpu.vector_store %arg10[%c0_20, %c0_21], %20 {strides = array<i32>} : memref<16x32xf32, #tpu.memory_space<vmem>>, vector<16x32xf32>,
    } else {
    }
    %c0_i32_16 = arith.constant 0 : i32
    %24 = arith.cmpi sgt, %arg1, %c0_i32_16 : i32
    %25 = arith.extui %24 : i1 to i32
    %c0_i32_17 = arith.constant 0 : i32
    %26 = arith.cmpi ne, %25, %c0_i32_17 : i32
    scf.if %26 {
      %c0_20 = arith.constant 0 : index
      %c0_21 = arith.constant 0 : index
      %30 = vector.load %arg10[%c0_20, %c0_21] : memref<16x32xf32, #tpu.memory_space<vmem>>, vector<16x32xf32>
      %31 = arith.addf %30, %20 : vector<16x32xf32>
      %c0_22 = arith.constant 0 : index
      %c0_23 = arith.constant 0 : index
      %32 = vector.load %arg10[%c0_22, %c0_23] : memref<16x32xf32, #tpu.memory_space<vmem>>, vector<16x32xf32>
      tpu.vector_store %arg10[%c0_22, %c0_23], %31 {strides = array<i32>} : memref<16x32xf32, #tpu.memory_space<vmem>>, vector<16x32xf32>,
    } else {
    }
    %c0_i32_18 = arith.constant 0 : i32
    %27 = arith.cmpi eq, %arg1, %c0_i32_18 : i32
    %28 = arith.extui %27 : i1 to i32
    %c0_i32_19 = arith.constant 0 : i32
    %29 = arith.cmpi ne, %28, %c0_i32_19 : i32
    scf.if %29 {
      %c0_20 = arith.constant 0 : index
      %c0_21 = arith.constant 0 : index
      %30 = vector.load %arg10[%c0_20, %c0_21] : memref<16x32xf32, #tpu.memory_space<vmem>>, vector<16x32xf32>
      %c0_22 = arith.constant 0 : index
      %c0_23 = arith.constant 0 : index
      %31 = vector.load %arg8[%c0_22, %c0_23] : memref<1x32xf32, #tpu.memory_space<vmem>>, vector<1x32xf32>
      %32 = vector.broadcast %31 : vector<1x32xf32> to vector<16x32xf32>
      %33 = arith.addf %30, %32 : vector<16x32xf32>
      %c0_24 = arith.constant 0 : index
      %c0_25 = arith.constant 0 : index
      %34 = vector.load %arg9[%c0_24, %c0_25] : memref<16x32xf32, #tpu.memory_space<vmem>>, vector<16x32xf32>
      tpu.vector_store %arg9[%c0_24, %c0_25], %33 {strides = array<i32>} : memref<16x32xf32, #tpu.memory_space<vmem>>, vector<16x32xf32>,
    } else {
    }
    return
  }
  func.func @transform_0(%arg0: i32, %arg1: i32) -> (i32, i32) {
    %c0_i32 = arith.constant 0 : i32
    %c0_i32_0 = arith.constant 0 : i32
    return %arg0, %c0_i32 : i32, i32
  }
  func.func @transform_1(%arg0: i32, %arg1: i32) -> (i32, i32) {
    %c0_i32 = arith.constant 0 : i32
    %c0_i32_0 = arith.constant 0 : i32
    return %c0_i32, %arg1 : i32, i32
  }
  func.func @transform_2(%arg0: i32, %arg1: i32) -> (i32, i32) {
    %c0_i32 = arith.constant 0 : i32
    %c0_i32_0 = arith.constant 0 : i32
    return %c0_i32, %arg1 : i32, i32
  }
  func.func @transform_3(%arg0: i32, %arg1: i32) -> (i32, i32) {
    %c0_i32 = arith.constant 0 : i32
    %c0_i32_0 = arith.constant 0 : i32
    return %c0_i32, %arg1 : i32, i32
  }
  func.func @transform_4(%arg0: i32, %arg1: i32) -> (i32, i32) {
    %c0_i32 = arith.constant 0 : i32
    %c0_i32_0 = arith.constant 0 : i32
    return %c0_i32, %arg1 : i32, i32
  }
  func.func @transform_5(%arg0: i32, %arg1: i32) -> (i32, i32) {
    %c0_i32 = arith.constant 0 : i32
    %c0_i32_0 = arith.constant 0 : i32
    return %arg1, %c0_i32 : i32, i32
  }
  func.func @transform_6(%arg0: i32, %arg1: i32) -> (i32, i32) {
    %c0_i32 = arith.constant 0 : i32
    %c0_i32_0 = arith.constant 0 : i32
    %c0_i32_1 = arith.constant 0 : i32
    return %c0_i32, %c0_i32_0 : i32, i32
  }
  func.func @transform_7(%arg0: i32, %arg1: i32) -> (i32, i32) {
    %c0_i32 = arith.constant 0 : i32
    %c0_i32_0 = arith.constant 0 : i32
    return %arg0, %c0_i32 : i32, i32
  }
}

</mosaic_0001>

<llo_original>
// kernel: tpu_custom_call.1
$region0: #{tpu_custom_call.1}
  #allocation0 [shape = 'u32[]', space=smem, size = 0x4, offset = 0x4, fixed_abs, tag = 'smem constant byte address 0x4 - core index']
  #allocation1 [shape = 'u32[144,128]{1,0:T(1,128)}', space=vmem, size = 0x12000, scoped, tag = 'internal scratch']
  #allocation2 [shape = 'f32[16,32]{1,0:T(8,128)}', space=vmem, size = 0x2000, scoped, tag = 'scratch operand']
  %s0 = inlined_call_operand.vmem [shape: f32[16,32], index: 0, kind: input, shape index: {}]
  %s1 = inlined_call_operand.vmem [shape: f32[32,128], index: 1, kind: input, shape index: {}]
  %s2 = inlined_call_operand.vmem [shape: f32[1,128], index: 2, kind: input, shape index: {}]
  %s3 = inlined_call_operand.vmem [shape: f32[32,128], index: 3, kind: input, shape index: {}]
  %s4 = inlined_call_operand.vmem [shape: f32[1,128], index: 4, kind: input, shape index: {}]
  %s5 = inlined_call_operand.vmem [shape: f32[128,32], index: 5, kind: input, shape index: {}]
  %s6 = inlined_call_operand.vmem [shape: f32[1,32], index: 6, kind: input, shape index: {}]
  %s7 = inlined_call_operand.hbm [shape: f32[16,32], index: 7, kind: output, shape index: {}]
  %s8 = sld [smem:[#allocation0]]
  $region50: #{tpu_custom_call.1} parent=0
    _
  %s10 = ssub.s32 1, %s8
  %s11 = scalar_select 0, %s10, %s8
  $region1: #{tpu_custom_call.1} parent=0
    #allocation3 [shape = 'u8[8192]{0}', space=vmem, size = 0x2000, scoped, tag = 'output window, operand 0, single buffered']
    #allocation4 [shape = 's32[1]{0}', space=sflag, size = 0x4, scoped, tag = 'scoped memory for tpu_custom_call.1']
    %12 = vsyncpa [#allocation4], 0
    // Predicated region
    $region2: #{tpu_custom_call.1} parent=1 // pred_check
      _
    $region3: #{tpu_custom_call.1} parent=1 // pred_check_branch
      %14 = sbr.rel (0) target = $region5
    $region4: #{tpu_custom_call.1} parent=1 // pred_region
      _
    $region5: #{tpu_custom_call.1} parent=1 // pred_fallthru
      _
    // Predicated region
    $region6: #{tpu_custom_call.1} parent=1 // pred_check
      _
    $region7: #{tpu_custom_call.1} parent=1 // pred_check_branch
      %16 = sbr.rel (0) target = $region9
    $region8: #{tpu_custom_call.1} parent=1 // pred_region
      _
    $region9: #{tpu_custom_call.1} parent=1 // pred_fallthru
      _
    // Predicated region
    $region10: #{tpu_custom_call.1} parent=1 // pred_check
      _
    $region11: #{tpu_custom_call.1} parent=1 // pred_check_branch
      %18 = sbr.rel (0) target = $region13
    $region12: #{tpu_custom_call.1} parent=1 // pred_region
      _
    $region13: #{tpu_custom_call.1} parent=1 // pred_fallthru
      _
    // Predicated region
    $region14: #{tpu_custom_call.1} parent=1 // pred_check
      _
    $region15: #{tpu_custom_call.1} parent=1 // pred_check_branch
      %20 = sbr.rel (0) target = $region17
    $region16: #{tpu_custom_call.1} parent=1 // pred_region
      _
    $region17: #{tpu_custom_call.1} parent=1 // pred_fallthru
      _
    // Predicated region
    $region18: #{tpu_custom_call.1} parent=1 // pred_check
      _
    $region19: #{tpu_custom_call.1} parent=1 // pred_check_branch
      %22 = sbr.rel (0) target = $region21
    $region20: #{tpu_custom_call.1} parent=1 // pred_region
      _
    $region21: #{tpu_custom_call.1} parent=1 // pred_fallthru
      _
    // Predicated region
    $region22: #{tpu_custom_call.1} parent=1 // pred_check
      _
    $region23: #{tpu_custom_call.1} parent=1 // pred_check_branch
      %24 = sbr.rel (0) target = $region25
    $region24: #{tpu_custom_call.1} parent=1 // pred_region
      _
    $region25: #{tpu_custom_call.1} parent=1 // pred_fallthru
      _
    // Predicated region
    $region26: #{tpu_custom_call.1} parent=1 // pred_check
      _
    $region27: #{tpu_custom_call.1} parent=1 // pred_check_branch
      %26 = sbr.rel (0) target = $region29
    $region28: #{tpu_custom_call.1} parent=1 // pred_region
      _
    $region29: #{tpu_custom_call.1} parent=1 // pred_fallthru
      _
    %v27 = vld [vmem:[%s0] sm:$0xff]
    %v28 = vld [vmem:[%s0 + $0x8] sm:$0xff]
    %v29 = vld [vmem:[%s1] sm:$0xff]
    %v30 = vld [vmem:[%s1 + $0x8] sm:$0xff]
    %v31 = vld [vmem:[%s1 + $0x10] sm:$0xff]
    %v32 = vld [vmem:[%s1 + $0x18] sm:$0xff]
    %v33 = vld [vmem:[%s2] sm:$0x1]
    %v35 = vlaneseq
    %v36 = vshrl.u32 %v35, 7
    %v37 = vsub.s32 0, %v36
    %v38 = vrot.slane %v33, %v37
    %vm40 = vcmask 261120
    %v42 = vsel %vm40, %v27, 0
    %v45 = vsel %vm40, %v28, 0
    %47 = vmatprep.subr.mxu0 0.0
    %48 = vmatpush1.msra.mxu0 %v29
    %49 = vmatprep.subr.mxu0 0.0
    %50 = vmatpush1.msra.mxu0 %v30
    %51 = vmatprep.subr.mxu0 0.0
    %52 = vmatpush1.msra.mxu0 %v31
    %53 = vmatprep.subr.mxu0 0.0
    %54 = vmatpush1.msra.mxu0 %v32
    %55 = vmatprep.subr.mxu0 0.0
    %56 = vmatpush1.msra.mxu0 0.0
    %57 = vmatprep.subr.mxu0 0.0
    %58 = vmatpush1.msra.mxu0 0.0
    %59 = vmatprep.subr.mxu0 0.0
    %60 = vmatpush1.msra.mxu0 0.0
    %61 = vmatprep.subr.mxu0 0.0
    %62 = vmatpush1.msra.mxu0 0.0
    %63 = vmatprep.subr.mxu0 0.0
    %64 = vmatpush1.msra.mxu0 0.0
    %65 = vmatprep.subr.mxu0 0.0
    %66 = vmatpush1.msra.mxu0 0.0
    %67 = vmatprep.subr.mxu0 0.0
    %68 = vmatpush1.msra.mxu0 0.0
    %69 = vmatprep.subr.mxu0 0.0
    %70 = vmatpush1.msra.mxu0 0.0
    %71 = vmatprep.subr.mxu0 0.0
    %72 = vmatpush1.msra.mxu0 0.0
    %73 = vmatprep.subr.mxu0 0.0
    %74 = vmatpush1.msra.mxu0 0.0
    %75 = vmatprep.subr.mxu0 0.0
    %76 = vmatpush1.msra.mxu0 0.0
    %77 = vmatprep.subr.mxu0 0.0
    %78 = vmatpush1.msra.mxu0 0.0
    %79 = vmatprep.subr.mxu0 0.0
    %80 = vmatpush1.msra.mxu0 0.0
    %81 = vmatprep.subr.mxu0 0.0
    %82 = vmatpush1.msra.mxu0 0.0
    %83 = vmatprep.subr.mxu0 0.0
    %84 = vmatpush1.msra.mxu0 0.0
    %85 = vmatprep.subr.mxu0 0.0
    %86 = vmatpush1.msra.mxu0 0.0
    %87 = vmatprep.subr.mxu0 0.0
    %88 = vmatpush1.msra.mxu0 0.0
    %89 = vmatprep.subr.mxu0 0.0
    %90 = vmatpush1.msra.mxu0 0.0
    %91 = vmatprep.subr.mxu0 0.0
    %92 = vmatpush1.msra.mxu0 0.0
    %93 = vmatprep.subr.mxu0 0.0
    %94 = vmatpush1.msra.mxu0 0.0
    %95 = vmatprep.subr.mxu0 0.0
    %96 = vmatpush1.msra.mxu0 0.0
    %97 = vmatprep.subr.mxu0 0.0
    %98 = vmatpush1.msra.mxu0 0.0
    %99 = vmatprep.subr.mxu0 0.0
    %100 = vmatpush1.msra.mxu0 0.0
    %101 = vmatprep.subr.mxu0 0.0
    %102 = vmatpush1.msra.mxu0 0.0
    %103 = vmatprep.subr.mxu0 0.0
    %104 = vmatpush1.msra.mxu0 0.0
    %105 = vmatprep.subr.mxu0 0.0
    %106 = vmatpush1.msra.mxu0 0.0
    %107 = vmatprep.subr.mxu0 0.0
    %108 = vmatpush1.msra.mxu0 0.0
    %109 = vmatprep.subr.mxu0 0.0
    %110 = vmatpush1.msra.mxu0 0.0
    %111 = vmatprep.mubr.f32.mxu0 0.0
    %112 = vmatmul.mubr.f32.gmra.mrb[0].mxu0 %v42
    %v113 = vpop.f32.mrb[0].mxu0
    %v114 = vadd.f32 %v38, %v113
    %v115 = vpop.f32.mrb[0].mxu0
    %116 = vmatprep.mubr.f32.mxu0 0.0
    %117 = vmatmul.mubr.f32.gmra.mrb[0].mxu0 %v45
    %v118 = vpop.f32.mrb[0].mxu0
    %v119 = vadd.f32 %v38, %v118
    %v120 = vpop.f32.mrb[0].mxu0
    %121 = vdwg.mxu0
    %v122 = vld [vmem:[%s3] sm:$0xff]
    %v123 = vld [vmem:[%s3 + $0x8] sm:$0xff]
    %v124 = vld [vmem:[%s3 + $0x10] sm:$0xff]
    %v125 = vld [vmem:[%s3 + $0x18] sm:$0xff]
    %v126 = vld [vmem:[%s4] sm:$0x1]
    %v128 = vlaneseq
    %v129 = vshrl.u32 %v128, 7
    %v130 = vsub.s32 0, %v129
    %v131 = vrot.slane %v126, %v130
    %133 = vmatprep.subr.mxu0 0.0
    %134 = vmatpush1.msra.mxu0 %v122
    %135 = vmatprep.subr.mxu0 0.0
    %136 = vmatpush1.msra.mxu0 %v123
    %137 = vmatprep.subr.mxu0 0.0
    %138 = vmatpush1.msra.mxu0 %v124
    %139 = vmatprep.subr.mxu0 0.0
    %140 = vmatpush1.msra.mxu0 %v125
    %141 = vmatprep.subr.mxu0 0.0
    %142 = vmatpush1.msra.mxu0 0.0
    %143 = vmatprep.subr.mxu0 0.0
    %144 = vmatpush1.msra.mxu0 0.0
    %145 = vmatprep.subr.mxu0 0.0
    %146 = vmatpush1.msra.mxu0 0.0
    %147 = vmatprep.subr.mxu0 0.0
    %148 = vmatpush1.msra.mxu0 0.0
    %149 = vmatprep.subr.mxu0 0.0
    %150 = vmatpush1.msra.mxu0 0.0
    %151 = vmatprep.subr.mxu0 0.0
    %152 = vmatpush1.msra.mxu0 0.0
    %153 = vmatprep.subr.mxu0 0.0
    %154 = vmatpush1.msra.mxu0 0.0
    %155 = vmatprep.subr.mxu0 0.0
    %156 = vmatpush1.msra.mxu0 0.0
    %157 = vmatprep.subr.mxu0 0.0
    %158 = vmatpush1.msra.mxu0 0.0
    %159 = vmatprep.subr.mxu0 0.0
    %160 = vmatpush1.msra.mxu0 0.0
    %161 = vmatprep.subr.mxu0 0.0
    %162 = vmatpush1.msra.mxu0 0.0
    %163 = vmatprep.subr.mxu0 0.0
    %164 = vmatpush1.msra.mxu0 0.0
    %165 = vmatprep.subr.mxu0 0.0
    %166 = vmatpush1.msra.mxu0 0.0
    %167 = vmatprep.subr.mxu0 0.0
    %168 = vmatpush1.msra.mxu0 0.0
    %169 = vmatprep.subr.mxu0 0.0
    %170 = vmatpush1.msra.mxu0 0.0
    %171 = vmatprep.subr.mxu0 0.0
    %172 = vmatpush1.msra.mxu0 0.0
    %173 = vmatprep.subr.mxu0 0.0
    %174 = vmatpush1.msra.mxu0 0.0
    %175 = vmatprep.subr.mxu0 0.0
    %176 = vmatpush1.msra.mxu0 0.0
    %177 = vmatprep.subr.mxu0 0.0
    %178 = vmatpush1.msra.mxu0 0.0
    %179 = vmatprep.subr.mxu0 0.0
    %180 = vmatpush1.msra.mxu0 0.0
    %181 = vmatprep.subr.mxu0 0.0
    %182 = vmatpush1.msra.mxu0 0.0
    %183 = vmatprep.subr.mxu0 0.0
    %184 = vmatpush1.msra.mxu0 0.0
    %185 = vmatprep.subr.mxu0 0.0
    %186 = vmatpush1.msra.mxu0 0.0
    %187 = vmatprep.subr.mxu0 0.0
    %188 = vmatpush1.msra.mxu0 0.0
    %189 = vmatprep.subr.mxu0 0.0
    %190 = vmatpush1.msra.mxu0 0.0
    %191 = vmatprep.subr.mxu0 0.0
    %192 = vmatpush1.msra.mxu0 0.0
    %193 = vmatprep.subr.mxu0 0.0
    %194 = vmatpush1.msra.mxu0 0.0
    %195 = vmatprep.subr.mxu0 0.0
    %196 = vmatpush1.msra.mxu0 0.0
    %197 = vmatprep.mubr.f32.mxu0 0.0
    %198 = vmatmul.mubr.f32.gmra.mrb[0].mxu0 %v42
    %v199 = vpop.f32.mrb[0].mxu0
    %v200 = vadd.f32 %v131, %v199
    %v201 = vpop.f32.mrb[0].mxu0
    %202 = vmatprep.mubr.f32.mxu0 0.0
    %203 = vmatmul.mubr.f32.gmra.mrb[0].mxu0 %v45
    %v204 = vpop.f32.mrb[0].mxu0
    %v205 = vadd.f32 %v131, %v204
    %v206 = vpop.f32.mrb[0].mxu0
    %207 = vdwg.mxu0
    %v208 = vsub.f32 0.0, %v114
    %v209 = vsub.f32 0.0, %v119
    %v210 = vmul.f32 %v208, 1.442695
    %v211 = vpow.pop %v210
    %v212 = vmul.f32 %v209, 1.442695
    %v213 = vpow.pop %v212
    %v214 = vadd.f32 %v211, 1.0
    %v215 = vadd.f32 %v213, 1.0
    %v216 = vrcp.pop %v214
    %v217 = vrcp.pop %v215
    %v218 = vmul.f32 %v114, %v216
    %v219 = vmul.f32 %v119, %v217
    %v220 = vmul.f32 %v218, %v200
    %v221 = vmul.f32 %v219, %v205
    %v222 = vld [vmem:[%s5] sm:$0xff]
    %v223 = vld [vmem:[%s5 + $0x8] sm:$0xff]
    %v224 = vld [vmem:[%s5 + $0x10] sm:$0xff]
    %v225 = vld [vmem:[%s5 + $0x18] sm:$0xff]
    %v226 = vld [vmem:[%s5 + $0x20] sm:$0xff]
    %v227 = vld [vmem:[%s5 + $0x28] sm:$0xff]
    %v228 = vld [vmem:[%s5 + $0x30] sm:$0xff]
    %v229 = vld [vmem:[%s5 + $0x38] sm:$0xff]
    %v230 = vld [vmem:[%s5 + $0x40] sm:$0xff]
    %v231 = vld [vmem:[%s5 + $0x48] sm:$0xff]
    %v232 = vld [vmem:[%s5 + $0x50] sm:$0xff]
    %v233 = vld [vmem:[%s5 + $0x58] sm:$0xff]
    %v234 = vld [vmem:[%s5 + $0x60] sm:$0xff]
    %v235 = vld [vmem:[%s5 + $0x68] sm:$0xff]
    %v236 = vld [vmem:[%s5 + $0x70] sm:$0xff]
    %v237 = vld [vmem:[%s5 + $0x78] sm:$0xff]
    %238 = vmatprep.subr.mxu0 0.0
    %239 = vmatpush1.msra.mxu0 %v222
    %240 = vmatprep.subr.mxu0 0.0
    %241 = vmatpush1.msra.mxu0 %v223
    %242 = vmatprep.subr.mxu0 0.0
    %243 = vmatpush1.msra.mxu0 %v224
    %244 = vmatprep.subr.mxu0 0.0
    %245 = vmatpush1.msra.mxu0 %v225
    %246 = vmatprep.subr.mxu0 0.0
    %247 = vmatpush1.msra.mxu0 %v226
    %248 = vmatprep.subr.mxu0 0.0
    %249 = vmatpush1.msra.mxu0 %v227
    %250 = vmatprep.subr.mxu0 0.0
    %251 = vmatpush1.msra.mxu0 %v228
    %252 = vmatprep.subr.mxu0 0.0
    %253 = vmatpush1.msra.mxu0 %v229
    %254 = vmatprep.subr.mxu0 0.0
    %255 = vmatpush1.msra.mxu0 %v230
    %256 = vmatprep.subr.mxu0 0.0
    %257 = vmatpush1.msra.mxu0 %v231
    %258 = vmatprep.subr.mxu0 0.0
    %259 = vmatpush1.msra.mxu0 %v232
    %260 = vmatprep.subr.mxu0 0.0
    %261 = vmatpush1.msra.mxu0 %v233
    %262 = vmatprep.subr.mxu0 0.0
    %263 = vmatpush1.msra.mxu0 %v234
    %264 = vmatprep.subr.mxu0 0.0
    %265 = vmatpush1.msra.mxu0 %v235
    %266 = vmatprep.subr.mxu0 0.0
    %267 = vmatpush1.msra.mxu0 %v236
    %268 = vmatprep.subr.mxu0 0.0
    %269 = vmatpush1.msra.mxu0 %v237
    %270 = vmatprep.subr.mxu0 0.0
    %271 = vmatpush1.msra.mxu0 0.0
    %272 = vmatprep.subr.mxu0 0.0
    %273 = vmatpush1.msra.mxu0 0.0
    %274 = vmatprep.subr.mxu0 0.0
    %275 = vmatpush1.msra.mxu0 0.0
    %276 = vmatprep.subr.mxu0 0.0
    %277 = vmatpush1.msra.mxu0 0.0
    %278 = vmatprep.subr.mxu0 0.0
    %279 = vmatpush1.msra.mxu0 0.0
    %280 = vmatprep.subr.mxu0 0.0
    %281 = vmatpush1.msra.mxu0 0.0
    %282 = vmatprep.subr.mxu0 0.0
    %283 = vmatpush1.msra.mxu0 0.0
    %284 = vmatprep.subr.mxu0 0.0
    %285 = vmatpush1.msra.mxu0 0.0
    %286 = vmatprep.subr.mxu0 0.0
    %287 = vmatpush1.msra.mxu0 0.0
    %288 = vmatprep.subr.mxu0 0.0
    %289 = vmatpush1.msra.mxu0 0.0
    %290 = vmatprep.subr.mxu0 0.0
    %291 = vmatpush1.msra.mxu0 0.0
    %292 = vmatprep.subr.mxu0 0.0
    %293 = vmatpush1.msra.mxu0 0.0
    %294 = vmatprep.subr.mxu0 0.0
    %295 = vmatpush1.msra.mxu0 0.0
    %296 = vmatprep.subr.mxu0 0.0
    %297 = vmatpush1.msra.mxu0 0.0
    %298 = vmatprep.subr.mxu0 0.0
    %299 = vmatpush1.msra.mxu0 0.0
    %300 = vmatprep.subr.mxu0 0.0
    %301 = vmatpush1.msra.mxu0 0.0
    %302 = vmatprep.mubr.f32.mxu0 0.0
    %303 = vmatmul.mubr.f32.gmra.mrb[0].mxu0 %v220
    %v304 = vpop.f32.mrb[0].mxu0
    %v305 = vadd.f32 0.0, %v304
    %v306 = vpop.f32.mrb[0].mxu0
    %307 = vmatprep.mubr.f32.mxu0 0.0
    %308 = vmatmul.mubr.f32.gmra.mrb[0].mxu0 %v221
    %v309 = vpop.f32.mrb[0].mxu0
    %v310 = vadd.f32 0.0, %v309
    %v311 = vpop.f32.mrb[0].mxu0
    %312 = vdwg.mxu0
    %p313 = scmp.eq.s32.totalorder 0, 0
    // Predicated region
    $region30: #{tpu_custom_call.1} parent=1 // pred_check
      %p314 = pneg %p313
    $region31: #{tpu_custom_call.1} parent=1 // pred_check_branch
      %316 = sbr.rel (%p314) target = $region33
    $region32: #{tpu_custom_call.1} parent=1 // pred_region
      %317 = vst.msk [vmem:[#allocation2] sm:$0xff] %vm40, %v305
      %318 = vst.msk [vmem:[#allocation2 + $0x8] sm:$0xff] %vm40, %v310
    $region33: #{tpu_custom_call.1} parent=1 // pred_fallthru
      _
    %p319 = scmp.gt.s32.totalorder 0, 0
    // Predicated region
    $region34: #{tpu_custom_call.1} parent=1 // pred_check
      %p320 = pneg %p319
    $region35: #{tpu_custom_call.1} parent=1 // pred_check_branch
      %322 = sbr.rel (%p320) target = $region37
    $region36: #{tpu_custom_call.1} parent=1 // pred_region
      %v323 = vld [vmem:[#allocation2] sm:$0xff]
      %v324 = vld [vmem:[#allocation2 + $0x8] sm:$0xff]
      %v325 = vadd.f32 %v323, %v305
      %v326 = vadd.f32 %v324, %v310
      %327 = vst.msk [vmem:[#allocation2] sm:$0xff] %vm40, %v325
      %328 = vst.msk [vmem:[#allocation2 + $0x8] sm:$0xff] %vm40, %v326
    $region37: #{tpu_custom_call.1} parent=1 // pred_fallthru
      _
    // Predicated region
    $region38: #{tpu_custom_call.1} parent=1 // pred_check
      %p329 = pneg %p313
    $region39: #{tpu_custom_call.1} parent=1 // pred_check_branch
      %331 = sbr.rel (%p329) target = $region41
    $region40: #{tpu_custom_call.1} parent=1 // pred_region
      %v332 = vld [vmem:[#allocation2] sm:$0xff]
      %v333 = vld [vmem:[#allocation2 + $0x8] sm:$0xff]
      %v334 = vld [vmem:[%s6] sm:$0x1]
      %v336 = vlaneseq
      %v337 = vshrl.u32 %v336, 7
      %v338 = vsub.s32 0, %v337
      %v339 = vrot.slane %v334, %v338
      %v341 = vadd.f32 %v332, %v339
      %v342 = vadd.f32 %v333, %v339
      %343 = vst.msk [vmem:[#allocation3] sm:$0xff] %vm40, %v341
      %344 = vst.msk [vmem:[#allocation3 + $0x8] sm:$0xff] %vm40, %v342
    $region41: #{tpu_custom_call.1} parent=1 // pred_fallthru
      _
    // Predicated region
    $region42: #{tpu_custom_call.1} parent=1 // pred_check
      _
    $region43: #{tpu_custom_call.1} parent=1 // pred_check_branch
      %346 = sbr.rel (0) target = $region45
    $region44: #{tpu_custom_call.1} parent=1 // pred_region
      %s348 = ssub.s32 256, 256
      %349 = vsyncadd [#allocation4], %s348
      %s350 = sshll.u32 [#allocation3], 4
      %s351 = int_to_ptr.vmem [resolvable:$true] %s350
      %356 = dma.vmem_to_hbm [thread:$0]  %s351, 256, %s7, [#allocation4], 128, 128, 8
    $region45: #{tpu_custom_call.1} parent=1 // pred_fallthru
      _
    // Predicated region
    $region46: #{tpu_custom_call.1} parent=1 // pred_check
      _
    $region47: #{tpu_custom_call.1} parent=1 // pred_check_branch
      %358 = sbr.rel (0) target = $region49
    $region48: #{tpu_custom_call.1} parent=1 // pred_region
      %359 = dma.done [#allocation4], 256
    $region49: #{tpu_custom_call.1} parent=1 // pred_fallthru
      _
    %360 = vsyncpa [#allocation4], 1

</llo_original>
